<compile_context>
chip_gen: v7x
topology: tpu7x:2x2x1
jax: 0.10.0
libtpu: 0.0.40
codegen_flags: <defaults>
</compile_context>

<pallas_src>
import functools
import math

import jax
import jax.numpy as jnp
import numpy as np
from jax.experimental import pallas as pl
from jax.experimental.pallas import tpu as pltpu


def _round_up(x: int, m: int) -> int:
    return ((x + m - 1) // m) * m


def _hole_kernel(a_ref, b_ref, wf_ref, wi_ref, o_ref):
    tb, g = a_ref.shape
    # Forward normalized real DFT of both inputs in a single MXU call:
    #   [a; b] @ [C | -S]  ->  [[ar, ai], [br, bi]]   (f32 accumulation)
    ab = jnp.concatenate([a_ref[...], b_ref[...]], axis=0)              # (2*TB, G)
    fw = jnp.dot(ab, wf_ref[...], preferred_element_type=jnp.float32)   # (2*TB, 2*G)
    ar, ai = fw[:tb, :g], fw[:tb, g:]
    br, bi = fw[tb:, :g], fw[tb:, g:]
    # conj(A) * B exactly as the torch module writes it (kept in f32 on the VPU).
    pr = ar * br + ai * bi
    pi = ar * bi - ai * br
    # Inverse normalized transform, real part: [pr | pi] @ [C ; -S] = pr@C - pi@S.
    p = jnp.concatenate([pr, pi], axis=1).astype(wi_ref.dtype)          # (TB, 2*G)
    out = jnp.dot(p, wi_ref[...], preferred_element_type=jnp.float32)   # (TB, G)
    o_ref[...] = out.astype(o_ref.dtype)


@functools.lru_cache(maxsize=None)
def _dft_bases(n: int, pack: int, gpad: int, dtype_name: str):
    """Block-diagonal normalized real-DFT bases, pre-stacked as W_fwd / W_inv."""
    idx = np.arange(n, dtype=np.int64)
    k = (idx[:, None] * idx[None, :]) % n                 # int64: no overflow for large N
    theta = 2.0 * np.pi * k.astype(np.float64) / n
    scale = 1.0 / math.sqrt(n)
    c = np.cos(theta) * scale
    s = np.sin(theta) * scale
    cb = np.zeros((gpad, gpad), dtype=np.float64)
    sb = np.zeros((gpad, gpad), dtype=np.float64)
    for p in range(pack):
        sl = slice(p * n, (p + 1) * n)
        cb[sl, sl] = c
        sb[sl, sl] = s
    w_fwd = np.concatenate([cb, -sb], axis=1).astype(np.float32)    # (G, 2G)
    w_inv = np.concatenate([cb, -sb], axis=0).astype(np.float32)    # (2G, G)
    dt = jnp.dtype(dtype_name)
    return jnp.asarray(w_fwd, dtype=dt), jnp.asarray(w_inv, dtype=dt)


def hole_circular_correlation(feat_1, feat_2, *, block_batch: int = 512,
                              operand_dtype=jnp.bfloat16):
    """HoleNN.forward: circular correlation of feat_1 and feat_2, shape (B, N).

    bf16 operands / f32 accumulation by default (fastest on the bf16-native MXUs);
    pass operand_dtype=jnp.float32 for a ~1e-6-accurate match of the FFT reference.
    """
    assert feat_1.shape == feat_2.shape and feat_1.ndim == 2
    B, N = feat_1.shape
    operand_dtype = jnp.dtype(operand_dtype)
    itemsize = operand_dtype.itemsize
    sub = 16 if itemsize == 2 else 8          # bf16 packs 16 rows/sublane-tile, f32 packs 8

    # Pack P rows of length N into one lane-dense row when N << 128 (block-diagonal
    # basis): the (B, N) problem becomes (B/P, P*N) with all 128 lanes doing real work.
    P = max(1, 128 // N)
    G = P * N
    Gpad = _round_up(G, 128)
    B_rows = _round_up(B, P)
    Bpack = B_rows // P

    # Batch tile: large enough to amortize ~0.35us/grid-step, bounded by a VMEM budget.
    max_tb = max(sub, ((24 << 20) // (48 * Gpad)) // sub * sub)
    TB = min(_round_up(min(block_batch, max(Bpack, 1)), sub), max_tb)
    Bpad = _round_up(Bpack, TB)

    w_fwd, w_inv = _dft_bases(N, P, Gpad, operand_dtype.name)

    def pack(x):
        x = jnp.pad(x, ((0, B_rows - B), (0, 0)))
        x = x.reshape(Bpack, G)
        x = jnp.pad(x, ((0, Bpad - Bpack), (0, Gpad - G)))
        return x.astype(operand_dtype)

    a = pack(feat_1)
    b = pack(feat_2)

    grid = (Bpad // TB,)

    # Explicit scoped-VMEM budget: double-buffered activation/output tiles + the
    # resident basis pair + elementwise/spill headroom.
    basis_bytes = 2 * 2 * (2 * Gpad * Gpad) * itemsize
    tile_bytes = 2 * 2 * TB * Gpad * itemsize + 2 * TB * Gpad * 4
    scratch_bytes = 16 * TB * Gpad * 4
    vmem_limit = int(min(max(basis_bytes + tile_bytes + scratch_bytes + (2 << 20),
                             32 << 20), 64 << 20))

    flops = 12 * Bpad * Gpad * Gpad                       # 8 (fwd) + 4 (inv) MACs*2
    bytes_accessed = ((2 * Bpad * Gpad + 4 * Gpad * Gpad) * itemsize
                      + Bpad * Gpad * 4)

    out = pl.pallas_call(
        _hole_kernel,
        out_shape=jax.ShapeDtypeStruct((Bpad, Gpad), jnp.float32),
        grid_spec=pltpu.PrefetchScalarGridSpec(
            num_scalar_prefetch=0,
            grid=grid,
            in_specs=[
                pl.BlockSpec((TB, Gpad), lambda i: (i, 0)),          # feat_1 tile
                pl.BlockSpec((TB, Gpad), lambda i: (i, 0)),          # feat_2 tile
                pl.BlockSpec((Gpad, 2 * Gpad), lambda i: (0, 0)),    # W_fwd (VMEM-resident)
                pl.BlockSpec((2 * Gpad, Gpad), lambda i: (0, 0)),    # W_inv (VMEM-resident)
            ],
            out_specs=pl.BlockSpec((TB, Gpad), lambda i: (i, 0)),
        ),
        compiler_params=pltpu.CompilerParams(
            dimension_semantics=("parallel",),
            vmem_limit_bytes=vmem_limit,
        ),
        cost_estimate=pl.CostEstimate(
            flops=int(flops), transcendentals=0, bytes_accessed=int(bytes_accessed)),
    )(a, b, w_fwd, w_inv)

    # Un-pack: drop padded lanes/rows, restore (B, N).
    return out[:Bpack, :G].reshape(B_rows, N)[:B]


if __name__ == "__main__":
    # Small shapes consistent with the module: two (batch, feat_size) embeddings.
    batch = 8
    feat_size = 32

    key = jax.random.PRNGKey(0)
    k1, k2 = jax.random.split(key)
    feat_1 = jax.random.normal(k1, (batch, feat_size), dtype=jnp.float32)
    feat_2 = jax.random.normal(k2, (batch, feat_size), dtype=jnp.float32)

    # Default fast path: bf16 MXU operands, f32 accumulation.
    out_bf16 = jax.block_until_ready(hole_circular_correlation(feat_1, feat_2))
    # Full-precision path for the tight numerical check against the FFT reference.
    out_f32 = jax.block_until_ready(
        hole_circular_correlation(feat_1, feat_2, operand_dtype=jnp.float32))

    # Pure-JAX reference with torch's normalized rfft/irfft convention:
    # ifft(conj(fft(a)) * fft(b)).real / sqrt(N).
    fa = jnp.fft.fft(feat_1, axis=-1)
    fb = jnp.fft.fft(feat_2, axis=-1)
    ref = jnp.real(jnp.fft.ifft(jnp.conj(fa) * fb, axis=-1)) / np.sqrt(feat_size)

    assert out_f32.shape == (batch, feat_size)
    assert out_bf16.shape == (batch, feat_size)
    err_f32 = float(jnp.max(jnp.abs(out_f32 - ref)))
    err_bf16 = float(jnp.max(jnp.abs(out_bf16 - ref)))
    assert jnp.allclose(out_f32, ref, atol=1e-4, rtol=1e-4), err_f32
    # bf16 operands: tolerance scaled to bf16 epsilon (math is identical, checked above).
    assert jnp.allclose(out_bf16, ref, atol=7e-2, rtol=7e-2), err_bf16

    print("KERNEL_OK")
</pallas_src>

<mosaic_0001>
module attributes {stable_mosaic.version = 11 : i64} {
  func.func @_hole_kernel(%arg0: i32, %arg1: memref<16x128xbf16, #tpu.memory_space<vmem>>, %arg2: memref<16x128xbf16, #tpu.memory_space<vmem>>, %arg3: memref<128x256xbf16, #tpu.memory_space<vmem>>, %arg4: memref<256x128xbf16, #tpu.memory_space<vmem>>, %arg5: memref<16x128xf32, #tpu.memory_space<vmem>>) attributes {dimension_semantics = [#tpu.dimension_semantics<parallel>], iteration_bounds = array<i64: 1>, scalar_prefetch = 0 : i64, scratch_operands = 0 : i64, tpu.core_type = #tpu.core_type<tc>, window_params = [{transform_indices = @transform_0, window_bounds = array<i64: 16, 128>}, {transform_indices = @transform_1, window_bounds = array<i64: 16, 128>}, {pipeline_mode = #tpu.pipeline_mode<synchronous>, transform_indices = @transform_2, window_bounds = array<i64: 128, 256>}, {pipeline_mode = #tpu.pipeline_mode<synchronous>, transform_indices = @transform_3, window_bounds = array<i64: 256, 128>}, {transform_indices = @transform_4, window_bounds = array<i64: 16, 128>}]} {
    %c0 = arith.constant 0 : index
    %c0_0 = arith.constant 0 : index
    %0 = vector.load %arg1[%c0, %c0_0] : memref<16x128xbf16, #tpu.memory_space<vmem>>, vector<16x128xbf16>
    %c0_1 = arith.constant 0 : index
    %c0_2 = arith.constant 0 : index
    %1 = vector.load %arg2[%c0_1, %c0_2] : memref<16x128xbf16, #tpu.memory_space<vmem>>, vector<16x128xbf16>
    %2 = tpu.concatenate %0, %1 in 0 : vector<16x128xbf16>, vector<16x128xbf16> -> vector<32x128xbf16>
    %c0_3 = arith.constant 0 : index
    %c0_4 = arith.constant 0 : index
    %3 = vector.load %arg3[%c0_3, %c0_4] : memref<128x256xbf16, #tpu.memory_space<vmem>>, vector<128x256xbf16>
    %cst = arith.constant dense<0.000000e+00> : vector<32x256xf32>
    %4 = tpu.matmul %2, %3, %cst {dimension_numbers = #tpu.dot_dimension_numbers<[1], [0], [0], [1], [0, 0, 1, 1], [], []>} : vector<32x128xbf16>, vector<128x256xbf16>, vector<32x256xf32> -> vector<32x256xf32>
    %5 = vector.extract_strided_slice %4 {offsets = [0, 0], sizes = [16, 128], strides = [1, 1]} : vector<32x256xf32> to vector<16x128xf32>
    %6 = vector.extract_strided_slice %4 {offsets = [0, 128], sizes = [16, 128], strides = [1, 1]} : vector<32x256xf32> to vector<16x128xf32>
    %7 = vector.extract_strided_slice %4 {offsets = [16, 0], sizes = [16, 128], strides = [1, 1]} : vector<32x256xf32> to vector<16x128xf32>
    %8 = vector.extract_strided_slice %4 {offsets = [16, 128], sizes = [16, 128], strides = [1, 1]} : vector<32x256xf32> to vector<16x128xf32>
    %9 = arith.mulf %5, %7 : vector<16x128xf32>
    %10 = arith.mulf %6, %8 : vector<16x128xf32>
    %11 = arith.addf %9, %10 : vector<16x128xf32>
    %12 = arith.mulf %5, %8 : vector<16x128xf32>
    %13 = arith.mulf %6, %7 : vector<16x128xf32>
    %14 = arith.subf %12, %13 : vector<16x128xf32>
    %15 = tpu.concatenate %11, %14 in 1 : vector<16x128xf32>, vector<16x128xf32> -> vector<16x256xf32>
    %16 = arith.truncf %15 : vector<16x256xf32> to vector<16x256xbf16>
    %c0_5 = arith.constant 0 : index
    %c0_6 = arith.constant 0 : index
    %17 = vector.load %arg4[%c0_5, %c0_6] : memref<256x128xbf16, #tpu.memory_space<vmem>>, vector<256x128xbf16>
    %cst_7 = arith.constant dense<0.000000e+00> : vector<16x128xf32>
    %18 = tpu.matmul %16, %17, %cst_7 {dimension_numbers = #tpu.dot_dimension_numbers<[1], [0], [0], [1], [0, 0, 1, 1], [], []>} : vector<16x256xbf16>, vector<256x128xbf16>, vector<16x128xf32> -> vector<16x128xf32>
    %c0_8 = arith.constant 0 : index
    %c0_9 = arith.constant 0 : index
    %19 = vector.load %arg5[%c0_8, %c0_9] : memref<16x128xf32, #tpu.memory_space<vmem>>, vector<16x128xf32>
    tpu.vector_store %arg5[%c0_8, %c0_9], %18 {strides = array<i32>} : memref<16x128xf32, #tpu.memory_space<vmem>>, vector<16x128xf32>,
    return
  }
  func.func @transform_0(%arg0: i32) -> (i32, i32) {
    %c0_i32 = arith.constant 0 : i32
    %c0_i32_0 = arith.constant 0 : i32
    return %arg0, %c0_i32 : i32, i32
  }
  func.func @transform_1(%arg0: i32) -> (i32, i32) {
    %c0_i32 = arith.constant 0 : i32
    %c0_i32_0 = arith.constant 0 : i32
    return %arg0, %c0_i32 : i32, i32
  }
  func.func @transform_2(%arg0: i32) -> (i32, i32) {
    %c0_i32 = arith.constant 0 : i32
    %c0_i32_0 = arith.constant 0 : i32
    %c0_i32_1 = arith.constant 0 : i32
    return %c0_i32, %c0_i32_0 : i32, i32
  }
  func.func @transform_3(%arg0: i32) -> (i32, i32) {
    %c0_i32 = arith.constant 0 : i32
    %c0_i32_0 = arith.constant 0 : i32
    %c0_i32_1 = arith.constant 0 : i32
    return %c0_i32, %c0_i32_0 : i32, i32
  }
  func.func @transform_4(%arg0: i32) -> (i32, i32) {
    %c0_i32 = arith.constant 0 : i32
    %c0_i32_0 = arith.constant 0 : i32
    return %arg0, %c0_i32 : i32, i32
  }
}

</mosaic_0001>

<llo_original>
// kernel: tpu_custom_call.1
$region0: #{tpu_custom_call.1}
  #allocation0 [shape = 'u32[]', space=smem, size = 0x4, offset = 0x4, fixed_abs, tag = 'smem constant byte address 0x4 - core index']
  #allocation1 [shape = 'u32[144,128]{1,0:T(1,128)}', space=vmem, size = 0x12000, scoped, tag = 'internal scratch']
  %s0 = inlined_call_operand.hbm [shape: bf16[16,128], index: 0, kind: input, shape index: {}]
  %s1 = inlined_call_operand.hbm [shape: bf16[16,128], index: 1, kind: input, shape index: {}]
  %s2 = inlined_call_operand.hbm [shape: bf16[128,256], index: 2, kind: input, shape index: {}]
  %s3 = inlined_call_operand.hbm [shape: bf16[256,128], index: 3, kind: input, shape index: {}]
  %s4 = inlined_call_operand.hbm [shape: f32[16,128], index: 4, kind: output, shape index: {}]
  %s5 = sld [smem:[#allocation0]]
  $region42: #{tpu_custom_call.1} parent=0
    _
  %s7 = ssub.s32 1, %s5
  %s8 = scalar_select 0, %s7, %s5
  $region1: #{tpu_custom_call.1} parent=0
    #allocation2 [shape = 'u8[4096]{0}', space=vmem, size = 0x1000, scoped, tag = 'input window, operand 0, single buffered']
    #allocation3 [shape = 's32[1]{0}', space=sflag, size = 0x4, scoped, tag = 'scoped memory for tpu_custom_call.1']
    #allocation4 [shape = 's32[1]{0}', space=sflag, size = 0x4, scoped, tag = 'scoped memory for tpu_custom_call.1']
    #allocation5 [shape = 'u8[4096]{0}', space=vmem, size = 0x1000, scoped, tag = 'input window, operand 1, single buffered']
    #allocation6 [shape = 's32[1]{0}', space=sflag, size = 0x4, scoped, tag = 'scoped memory for tpu_custom_call.1']
    #allocation7 [shape = 'u8[65536]{0}', space=vmem, size = 0x10000, scoped, tag = 'input window, operand 2, single buffered']
    #allocation8 [shape = 'u8[65536]{0}', space=vmem, size = 0x10000, scoped, tag = 'input window, operand 3, single buffered']
    #allocation9 [shape = 's32[1]{0}', space=sflag, size = 0x4, scoped, tag = 'scoped memory for tpu_custom_call.1']
    #allocation10 [shape = 'u8[8192]{0}', space=vmem, size = 0x2000, scoped, tag = 'output window, operand 0, single buffered']
    %9 = vsyncpa [#allocation3], 0
    %10 = vsyncpa [#allocation6], 0
    %11 = vsyncpa [#allocation9], 0
    %12 = vsyncpa [#allocation4], 0
    // Predicated region
    $region2: #{tpu_custom_call.1} parent=1 // pred_check
      _
    $region3: #{tpu_custom_call.1} parent=1 // pred_check_branch
      %14 = sbr.rel (0) target = $region5
    $region4: #{tpu_custom_call.1} parent=1 // pred_region
      %s16 = ssub.s32 128, 128
      %17 = vsyncadd [#allocation3], %s16
      %s18 = sshll.u32 [#allocation2], 4
      %s19 = int_to_ptr.vmem [resolvable:$true] %s18
      %24 = dma.hbm_to_vmem [thread:$0]  %s0, 128, %s19, [#allocation3], 64, 64, 4
    $region5: #{tpu_custom_call.1} parent=1 // pred_fallthru
      _
    // Predicated region
    $region6: #{tpu_custom_call.1} parent=1 // pred_check
      _
    $region7: #{tpu_custom_call.1} parent=1 // pred_check_branch
      %26 = sbr.rel (0) target = $region9
    $region8: #{tpu_custom_call.1} parent=1 // pred_region
      %s28 = ssub.s32 128, 128
      %29 = vsyncadd [#allocation6], %s28
      %s30 = sshll.u32 [#allocation5], 4
      %s31 = int_to_ptr.vmem [resolvable:$true] %s30
      %36 = dma.hbm_to_vmem [thread:$0]  %s1, 128, %s31, [#allocation6], 64, 64, 4
    $region9: #{tpu_custom_call.1} parent=1 // pred_fallthru
      _
    // Predicated region
    $region10: #{tpu_custom_call.1} parent=1 // pred_check
      _
    $region11: #{tpu_custom_call.1} parent=1 // pred_check_branch
      %38 = sbr.rel (0) target = $region13
    $region12: #{tpu_custom_call.1} parent=1 // pred_region
      %s40 = ssub.s32 2048, 2048
      %41 = vsyncadd [#allocation6], %s40
      %s42 = sshll.u32 [#allocation7], 4
      %s43 = int_to_ptr.vmem [resolvable:$true] %s42
      %48 = dma.hbm_to_vmem [thread:$0]  %s2, 2048, %s43, [#allocation6], 128, 128, 8
    $region13: #{tpu_custom_call.1} parent=1 // pred_fallthru
      _
    // Predicated region
    $region14: #{tpu_custom_call.1} parent=1 // pred_check
      _
    $region15: #{tpu_custom_call.1} parent=1 // pred_check_branch
      %50 = sbr.rel (0) target = $region17
    $region16: #{tpu_custom_call.1} parent=1 // pred_region
      %s52 = ssub.s32 2048, 2048
      %53 = vsyncadd [#allocation9], %s52
      %s54 = sshll.u32 [#allocation8], 4
      %s55 = int_to_ptr.vmem [resolvable:$true] %s54
      %60 = dma.hbm_to_vmem [thread:$0]  %s3, 2048, %s55, [#allocation9], 64, 64, 4
    $region17: #{tpu_custom_call.1} parent=1 // pred_fallthru
      _
    // Predicated region
    $region18: #{tpu_custom_call.1} parent=1 // pred_check
      _
    $region19: #{tpu_custom_call.1} parent=1 // pred_check_branch
      %62 = sbr.rel (0) target = $region21
    $region20: #{tpu_custom_call.1} parent=1 // pred_region
      %63 = dma.done [#allocation3], 128
    $region21: #{tpu_custom_call.1} parent=1 // pred_fallthru
      _
    // Predicated region
    $region22: #{tpu_custom_call.1} parent=1 // pred_check
      _
    $region23: #{tpu_custom_call.1} parent=1 // pred_check_branch
      %65 = sbr.rel (0) target = $region25
    $region24: #{tpu_custom_call.1} parent=1 // pred_region
      %66 = dma.done [#allocation6], 128
    $region25: #{tpu_custom_call.1} parent=1 // pred_fallthru
      _
    // Predicated region
    $region26: #{tpu_custom_call.1} parent=1 // pred_check
      _
    $region27: #{tpu_custom_call.1} parent=1 // pred_check_branch
      %68 = sbr.rel (0) target = $region29
    $region28: #{tpu_custom_call.1} parent=1 // pred_region
      %69 = dma.done [#allocation6], 2048
    $region29: #{tpu_custom_call.1} parent=1 // pred_fallthru
      _
    // Predicated region
    $region30: #{tpu_custom_call.1} parent=1 // pred_check
      _
    $region31: #{tpu_custom_call.1} parent=1 // pred_check_branch
      %71 = sbr.rel (0) target = $region33
    $region32: #{tpu_custom_call.1} parent=1 // pred_region
      %72 = dma.done [#allocation9], 2048
    $region33: #{tpu_custom_call.1} parent=1 // pred_fallthru
      _
    %v74 = vld [vmem:[#allocation2] sm:$0xf]
    %v75 = vld [vmem:[#allocation2 + $0x4] sm:$0xf]
    %v76 = vld [vmem:[#allocation5] sm:$0xf]
    %v77 = vld [vmem:[#allocation5 + $0x4] sm:$0xf]
    %v80 = vunpack.c.l.b16 %v74
    %v81 = vunpack.c.l.b16 %v75
    %v82 = vpack.c.b16 %v81, %v80
    %v86 = vunpack.c.l.b16 %v76
    %v87 = vunpack.c.l.b16 %v77
    %v88 = vpack.c.b16 %v87, %v86
    %v90 = vld [vmem:[#allocation7] sm:$0xff]
    %v91 = vld [vmem:[#allocation7 + $0x8] sm:$0xff]
    %v92 = vld [vmem:[#allocation7 + $0x10] sm:$0xff]
    %v93 = vld [vmem:[#allocation7 + $0x18] sm:$0xff]
    %v94 = vld [vmem:[#allocation7 + $0x20] sm:$0xff]
    %v95 = vld [vmem:[#allocation7 + $0x28] sm:$0xff]
    %v96 = vld [vmem:[#allocation7 + $0x30] sm:$0xff]
    %v97 = vld [vmem:[#allocation7 + $0x38] sm:$0xff]
    %v98 = vld [vmem:[#allocation7 + $0x40] sm:$0xff]
    %v99 = vld [vmem:[#allocation7 + $0x48] sm:$0xff]
    %v100 = vld [vmem:[#allocation7 + $0x50] sm:$0xff]
    %v101 = vld [vmem:[#allocation7 + $0x58] sm:$0xff]
    %v102 = vld [vmem:[#allocation7 + $0x60] sm:$0xff]
    %v103 = vld [vmem:[#allocation7 + $0x68] sm:$0xff]
    %v104 = vld [vmem:[#allocation7 + $0x70] sm:$0xff]
    %v105 = vld [vmem:[#allocation7 + $0x78] sm:$0xff]
    %v122 = vunpack.c.l.b16 %v90
    %v123 = vunpack.c.h.b16 %v90
    %v124 = vunpack.c.l.b16 %v91
    %v125 = vunpack.c.h.b16 %v91
    %v126 = vunpack.c.l.b16 %v92
    %v127 = vunpack.c.h.b16 %v92
    %v128 = vunpack.c.l.b16 %v93
    %v129 = vunpack.c.h.b16 %v93
    %v130 = vunpack.c.l.b16 %v94
    %v131 = vunpack.c.h.b16 %v94
    %v132 = vunpack.c.l.b16 %v95
    %v133 = vunpack.c.h.b16 %v95
    %v134 = vunpack.c.l.b16 %v96
    %v135 = vunpack.c.h.b16 %v96
    %v136 = vunpack.c.l.b16 %v97
    %v137 = vunpack.c.h.b16 %v97
    %v138 = vunpack.c.l.b16 %v98
    %v139 = vunpack.c.h.b16 %v98
    %v140 = vunpack.c.l.b16 %v99
    %v141 = vunpack.c.h.b16 %v99
    %v142 = vunpack.c.l.b16 %v100
    %v143 = vunpack.c.h.b16 %v100
    %v144 = vunpack.c.l.b16 %v101
    %v145 = vunpack.c.h.b16 %v101
    %v146 = vunpack.c.l.b16 %v102
    %v147 = vunpack.c.h.b16 %v102
    %v148 = vunpack.c.l.b16 %v103
    %v149 = vunpack.c.h.b16 %v103
    %v150 = vunpack.c.l.b16 %v104
    %v151 = vunpack.c.h.b16 %v104
    %v152 = vunpack.c.l.b16 %v105
    %v153 = vunpack.c.h.b16 %v105
    %v154 = vpack.c.b16 %v124, %v122
    %v155 = vpack.c.b16 %v125, %v123
    %v156 = vpack.c.b16 %v128, %v126
    %v157 = vpack.c.b16 %v129, %v127
    %v158 = vpack.c.b16 %v132, %v130
    %v159 = vpack.c.b16 %v133, %v131
    %v160 = vpack.c.b16 %v136, %v134
    %v161 = vpack.c.b16 %v137, %v135
    %v162 = vpack.c.b16 %v140, %v138
    %v163 = vpack.c.b16 %v141, %v139
    %v164 = vpack.c.b16 %v144, %v142
    %v165 = vpack.c.b16 %v145, %v143
    %v166 = vpack.c.b16 %v148, %v146
    %v167 = vpack.c.b16 %v149, %v147
    %v168 = vpack.c.b16 %v152, %v150
    %v169 = vpack.c.b16 %v153, %v151
    %186 = vmatprep.subr.bf16.mxu0 %v155
    %187 = vmatpush1.bf16.msra.mxu0 %v154
    %188 = vmatprep.subr.bf16.mxu0 %v157
    %189 = vmatpush1.bf16.msra.mxu0 %v156
    %190 = vmatprep.subr.bf16.mxu0 %v159
    %191 = vmatpush1.bf16.msra.mxu0 %v158
    %192 = vmatprep.subr.bf16.mxu0 %v161
    %193 = vmatpush1.bf16.msra.mxu0 %v160
    %194 = vmatprep.subr.bf16.mxu0 %v163
    %195 = vmatpush1.bf16.msra.mxu0 %v162
    %196 = vmatprep.subr.bf16.mxu0 %v165
    %197 = vmatpush1.bf16.msra.mxu0 %v164
    %198 = vmatprep.subr.bf16.mxu0 %v167
    %199 = vmatpush1.bf16.msra.mxu0 %v166
    %200 = vmatprep.subr.bf16.mxu0 %v169
    %201 = vmatpush1.bf16.msra.mxu0 %v168
    %202 = vmatprep.subr.bf16.mxu0 0
    %203 = vmatpush1.bf16.msra.mxu0 0
    %204 = vmatprep.subr.bf16.mxu0 0
    %205 = vmatpush1.bf16.msra.mxu0 0
    %206 = vmatprep.subr.bf16.mxu0 0
    %207 = vmatpush1.bf16.msra.mxu0 0
    %208 = vmatprep.subr.bf16.mxu0 0
    %209 = vmatpush1.bf16.msra.mxu0 0
    %210 = vmatprep.subr.bf16.mxu0 0
    %211 = vmatpush1.bf16.msra.mxu0 0
    %212 = vmatprep.subr.bf16.mxu0 0
    %213 = vmatpush1.bf16.msra.mxu0 0
    %214 = vmatprep.subr.bf16.mxu0 0
    %215 = vmatpush1.bf16.msra.mxu0 0
    %216 = vmatprep.subr.bf16.mxu0 0
    %217 = vmatpush1.bf16.msra.mxu0 0
    %218 = vmatprep.mubr.bf16.mxu0 0
    %219 = vmatmul.mubr.bf16.gmra.mrb[0].mxu0 %v82
    %v220 = vpop.f32.mrb[0].mxu0
    %v221 = vadd.f32 0.0, %v220
    %v222 = vpop.f32.mrb[0].mxu0
    %v223 = vadd.f32 0.0, %v222
    %v224 = vpop.f32.mrb[0].mxu0
    %v225 = vadd.f32 0.0, %v224
    %v226 = vpop.f32.mrb[0].mxu0
    %v227 = vadd.f32 0.0, %v226
    %228 = vmatprep.mubr.bf16.mxu0 0
    %229 = vmatmul.mubr.bf16.gmra.mrb[0].mxu0 %v88
    %v230 = vpop.f32.mrb[0].mxu0
    %v231 = vadd.f32 0.0, %v230
    %v232 = vpop.f32.mrb[0].mxu0
    %v233 = vadd.f32 0.0, %v232
    %v234 = vpop.f32.mrb[0].mxu0
    %v235 = vadd.f32 0.0, %v234
    %v236 = vpop.f32.mrb[0].mxu0
    %v237 = vadd.f32 0.0, %v236
    %238 = vdwg.mxu0
    %v239 = vmul.f32 %v221, %v231
    %v240 = vmul.f32 %v225, %v235
    %v241 = vmul.f32 %v223, %v233
    %v242 = vmul.f32 %v227, %v237
    %v243 = vadd.f32 %v239, %v241
    %v244 = vadd.f32 %v240, %v242
    %v245 = vmul.f32 %v221, %v233
    %v246 = vmul.f32 %v225, %v237
    %v247 = vmul.f32 %v223, %v231
    %v248 = vmul.f32 %v227, %v235
    %v249 = vsub.f32 %v245, %v247
    %v250 = vsub.f32 %v246, %v248
    %v251 = vpack.c.bf16 %v244, %v243
    %v252 = vpack.c.bf16 %v250, %v249
    %v253 = vld [vmem:[#allocation8] sm:$0xf]
    %v254 = vld [vmem:[#allocation8 + $0x4] sm:$0xf]
    %v255 = vld [vmem:[#allocation8 + $0x8] sm:$0xf]
    %v256 = vld [vmem:[#allocation8 + $0xc] sm:$0xf]
    %v257 = vld [vmem:[#allocation8 + $0x10] sm:$0xf]
    %v258 = vld [vmem:[#allocation8 + $0x14] sm:$0xf]
    %v259 = vld [vmem:[#allocation8 + $0x18] sm:$0xf]
    %v260 = vld [vmem:[#allocation8 + $0x1c] sm:$0xf]
    %v261 = vld [vmem:[#allocation8 + $0x20] sm:$0xf]
    %v262 = vld [vmem:[#allocation8 + $0x24] sm:$0xf]
    %v263 = vld [vmem:[#allocation8 + $0x28] sm:$0xf]
    %v264 = vld [vmem:[#allocation8 + $0x2c] sm:$0xf]
    %v265 = vld [vmem:[#allocation8 + $0x30] sm:$0xf]
    %v266 = vld [vmem:[#allocation8 + $0x34] sm:$0xf]
    %v267 = vld [vmem:[#allocation8 + $0x38] sm:$0xf]
    %v268 = vld [vmem:[#allocation8 + $0x3c] sm:$0xf]
    %v269 = vld [vmem:[#allocation8 + $0x40] sm:$0xf]
    %v270 = vld [vmem:[#allocation8 + $0x44] sm:$0xf]
    %v271 = vld [vmem:[#allocation8 + $0x48] sm:$0xf]
    %v272 = vld [vmem:[#allocation8 + $0x4c] sm:$0xf]
    %v273 = vld [vmem:[#allocation8 + $0x50] sm:$0xf]
    %v274 = vld [vmem:[#allocation8 + $0x54] sm:$0xf]
    %v275 = vld [vmem:[#allocation8 + $0x58] sm:$0xf]
    %v276 = vld [vmem:[#allocation8 + $0x5c] sm:$0xf]
    %v277 = vld [vmem:[#allocation8 + $0x60] sm:$0xf]
    %v278 = vld [vmem:[#allocation8 + $0x64] sm:$0xf]
    %v279 = vld [vmem:[#allocation8 + $0x68] sm:$0xf]
    %v280 = vld [vmem:[#allocation8 + $0x6c] sm:$0xf]
    %v281 = vld [vmem:[#allocation8 + $0x70] sm:$0xf]
    %v282 = vld [vmem:[#allocation8 + $0x74] sm:$0xf]
    %v283 = vld [vmem:[#allocation8 + $0x78] sm:$0xf]
    %v284 = vld [vmem:[#allocation8 + $0x7c] sm:$0xf]
    %v317 = vunpack.c.l.b16 %v253
    %v318 = vunpack.c.l.b16 %v254
    %v319 = vunpack.c.l.b16 %v255
    %v320 = vunpack.c.l.b16 %v256
    %v321 = vunpack.c.l.b16 %v257
    %v322 = vunpack.c.l.b16 %v258
    %v323 = vunpack.c.l.b16 %v259
    %v324 = vunpack.c.l.b16 %v260
    %v325 = vunpack.c.l.b16 %v261
    %v326 = vunpack.c.l.b16 %v262
    %v327 = vunpack.c.l.b16 %v263
    %v328 = vunpack.c.l.b16 %v264
    %v329 = vunpack.c.l.b16 %v265
    %v330 = vunpack.c.l.b16 %v266
    %v331 = vunpack.c.l.b16 %v267
    %v332 = vunpack.c.l.b16 %v268
    %v333 = vunpack.c.l.b16 %v269
    %v334 = vunpack.c.l.b16 %v270
    %v335 = vunpack.c.l.b16 %v271
    %v336 = vunpack.c.l.b16 %v272
    %v337 = vunpack.c.l.b16 %v273
    %v338 = vunpack.c.l.b16 %v274
    %v339 = vunpack.c.l.b16 %v275
    %v340 = vunpack.c.l.b16 %v276
    %v341 = vunpack.c.l.b16 %v277
    %v342 = vunpack.c.l.b16 %v278
    %v343 = vunpack.c.l.b16 %v279
    %v344 = vunpack.c.l.b16 %v280
    %v345 = vunpack.c.l.b16 %v281
    %v346 = vunpack.c.l.b16 %v282
    %v347 = vunpack.c.l.b16 %v283
    %v348 = vunpack.c.l.b16 %v284
    %v349 = vpack.c.b16 %v318, %v317
    %v350 = vpack.c.b16 %v320, %v319
    %v351 = vpack.c.b16 %v322, %v321
    %v352 = vpack.c.b16 %v324, %v323
    %v353 = vpack.c.b16 %v326, %v325
    %v354 = vpack.c.b16 %v328, %v327
    %v355 = vpack.c.b16 %v330, %v329
    %v356 = vpack.c.b16 %v332, %v331
    %v357 = vpack.c.b16 %v334, %v333
    %v358 = vpack.c.b16 %v336, %v335
    %v359 = vpack.c.b16 %v338, %v337
    %v360 = vpack.c.b16 %v340, %v339
    %v361 = vpack.c.b16 %v342, %v341
    %v362 = vpack.c.b16 %v344, %v343
    %v363 = vpack.c.b16 %v346, %v345
    %v364 = vpack.c.b16 %v348, %v347
    %381 = vmatprep.subr.bf16.mxu0 0
    %382 = vmatpush1.bf16.msra.mxu0 %v349
    %383 = vmatprep.subr.bf16.mxu0 0
    %384 = vmatpush1.bf16.msra.mxu0 %v350
    %385 = vmatprep.subr.bf16.mxu0 0
    %386 = vmatpush1.bf16.msra.mxu0 %v351
    %387 = vmatprep.subr.bf16.mxu0 0
    %388 = vmatpush1.bf16.msra.mxu0 %v352
    %389 = vmatprep.subr.bf16.mxu0 0
    %390 = vmatpush1.bf16.msra.mxu0 %v353
    %391 = vmatprep.subr.bf16.mxu0 0
    %392 = vmatpush1.bf16.msra.mxu0 %v354
    %393 = vmatprep.subr.bf16.mxu0 0
    %394 = vmatpush1.bf16.msra.mxu0 %v355
    %395 = vmatprep.subr.bf16.mxu0 0
    %396 = vmatpush1.bf16.msra.mxu0 %v356
    %397 = vmatprep.subr.bf16.mxu0 0
    %398 = vmatpush1.bf16.msra.mxu0 %v357
    %399 = vmatprep.subr.bf16.mxu0 0
    %400 = vmatpush1.bf16.msra.mxu0 %v358
    %401 = vmatprep.subr.bf16.mxu0 0
    %402 = vmatpush1.bf16.msra.mxu0 %v359
    %403 = vmatprep.subr.bf16.mxu0 0
    %404 = vmatpush1.bf16.msra.mxu0 %v360
    %405 = vmatprep.subr.bf16.mxu0 0
    %406 = vmatpush1.bf16.msra.mxu0 %v361
    %407 = vmatprep.subr.bf16.mxu0 0
    %408 = vmatpush1.bf16.msra.mxu0 %v362
    %409 = vmatprep.subr.bf16.mxu0 0
    %410 = vmatpush1.bf16.msra.mxu0 %v363
    %411 = vmatprep.subr.bf16.mxu0 0
    %412 = vmatpush1.bf16.msra.mxu0 %v364
    %413 = vmatprep.mubr.bf16.mxu0 %v252
    %414 = vmatmul.mubr.bf16.gmra.mrb[0].mxu0 %v251
    %v415 = vpop.f32.mrb[0].mxu0
    %v416 = vadd.f32 0.0, %v415
    %v417 = vpop.f32.mrb[0].mxu0
    %v418 = vpop.f32.mrb[0].mxu0
    %v419 = vadd.f32 0.0, %v418
    %v420 = vpop.f32.mrb[0].mxu0
    %421 = vdwg.mxu0
    %422 = vst [vmem:[#allocation10] sm:$0xff] %v416
    %423 = vst [vmem:[#allocation10 + $0x8] sm:$0xff] %v419
    // Predicated region
    $region34: #{tpu_custom_call.1} parent=1 // pred_check
      _
    $region35: #{tpu_custom_call.1} parent=1 // pred_check_branch
      %425 = sbr.rel (0) target = $region37
    $region36: #{tpu_custom_call.1} parent=1 // pred_region
      %s427 = ssub.s32 256, 256
      %428 = vsyncadd [#allocation4], %s427
      %s429 = sshll.u32 [#allocation10], 4
      %s430 = int_to_ptr.vmem [resolvable:$true] %s429
      %435 = dma.vmem_to_hbm [thread:$0]  %s430, 256, %s4, [#allocation4], 128, 128, 8
    $region37: #{tpu_custom_call.1} parent=1 // pred_fallthru
      _
    // Predicated region
    $region38: #{tpu_custom_call.1} parent=1 // pred_check
      _
    $region39: #{tpu_custom_call.1} parent=1 // pred_check_branch
      %437 = sbr.rel (0) target = $region41
    $region40: #{tpu_custom_call.1} parent=1 // pred_region
      %438 = dma.done [#allocation4], 256
    $region41: #{tpu_custom_call.1} parent=1 // pred_fallthru
      _
    %439 = vsyncpa [#allocation3], 1
    %440 = vsyncpa [#allocation6], 1
    %441 = vsyncpa [#allocation9], 1
    %442 = vsyncpa [#allocation4], 1

</llo_original>
